<compile_context>
chip_gen: v7x
topology: tpu7x:2x2x1
jax: 0.10.0
libtpu: 0.0.40
codegen_flags: <defaults>
</compile_context>

<pallas_src>
import functools
import math

import jax
import jax.numpy as jnp
from jax.experimental import pallas as pl
from jax.experimental.pallas import tpu as pltpu

_MiB = 1024 * 1024


def _vmem_capacity_bytes():
    try:
        return int(pltpu.get_tpu_info().vmem_capacity_bytes)
    except Exception:
        return 64 * _MiB  # conservative default (v7x per-TensorCore VMEM)


def _sublane_mult(dtype):
    # Packed sublane count: 8 for f32, 16 for bf16, 32 for int8.
    return max(8, 32 // jnp.dtype(dtype).itemsize)


# --------------- Path A: chunked HBM->HBM DMA copy (preferred) --------------
def _hbm_dma_copy_kernel(x_hbm, o_hbm, sems, *, row_chunks):
    # Issue all chunk copies (up to 4 in flight), then wait on all of them.
    copies = []
    off = 0
    for c, rows in enumerate(row_chunks):
        cp = pltpu.make_async_copy(
            x_hbm.at[pl.ds(off, rows), :],
            o_hbm.at[pl.ds(off, rows), :],
            sems.at[c],
        )
        cp.start()
        copies.append(cp)
        off += rows
    for cp in copies:
        cp.wait()


def _dma_row_chunks(R, sub):
    n = min(4, max(1, R // sub))
    if n <= 1:
        return (R,)
    base = ((R // n) // sub) * sub          # sublane-aligned chunk size
    chunks = [base] * (n - 1)
    chunks.append(R - base * (n - 1))       # remainder goes to the last chunk
    return tuple(chunks)


def _hbm_dma_copy(flat2d):
    R, L = flat2d.shape
    itemsize = jnp.dtype(flat2d.dtype).itemsize
    row_chunks = _dma_row_chunks(R, _sublane_mult(flat2d.dtype))
    return pl.pallas_call(
        functools.partial(_hbm_dma_copy_kernel, row_chunks=row_chunks),
        out_shape=jax.ShapeDtypeStruct((R, L), flat2d.dtype),
        in_specs=[pl.BlockSpec(memory_space=pl.ANY)],
        out_specs=pl.BlockSpec(memory_space=pl.ANY),
        scratch_shapes=[pltpu.SemaphoreType.DMA((len(row_chunks),))],
        cost_estimate=pl.CostEstimate(
            flops=0, transcendentals=0, bytes_accessed=2 * R * L * itemsize),
    )(flat2d)


_HBM_DMA_OK = None


def _hbm_dma_supported():
    """One-time eager probe: fall back if local HBM->HBM DMA is rejected."""
    global _HBM_DMA_OK
    if _HBM_DMA_OK is None:
        try:
            probe = jnp.arange(16 * 128, dtype=jnp.float32).reshape(16, 128)
            out = jax.block_until_ready(_hbm_dma_copy(probe))
            _HBM_DMA_OK = bool(jnp.array_equal(out, probe))
        except Exception:
            _HBM_DMA_OK = False
    return _HBM_DMA_OK


# ------------- Path B: VMEM-pipelined identity copy (fallback) --------------
def _vmem_copy_kernel(x_ref, o_ref):
    o_ref[...] = x_ref[...]


def _vmem_pipeline_copy(flat2d):
    R, L = flat2d.shape
    itemsize = jnp.dtype(flat2d.dtype).itemsize
    sub = _sublane_mult(flat2d.dtype)

    vmem_cap = _vmem_capacity_bytes()
    # v7x (64 MiB VMEM / 3.2 TB/s HBM): larger blocks amortize per-step
    # overhead.  v5e/v6e (128 MiB VMEM): streaming roofline plateaus ~1-4 MiB.
    target_block_bytes = 8 * _MiB if vmem_cap < 96 * _MiB else 4 * _MiB

    if R <= 2 * sub:
        tile_rows = R                        # tiny array: one full-extent block
        grid = (1,)
    else:
        cap = target_block_bytes // (L * itemsize)
        cap = min(cap, pl.cdiv(R, 4))        # >= 4 steps so inbound DMA /
        cap = max(sub, (cap // sub) * sub)   #   vreg copy / writeback overlap
        tile_rows = None
        for t in range(cap, sub - 1, -sub):  # prefer a divisor of R so every
            if R % t == 0:                   #   step is a full unmasked block
                tile_rows = t
                break
        if tile_rows is None:
            tile_rows = cap                  # ragged last block (masked)
        grid = (pl.cdiv(R, tile_rows),)

    block_bytes = tile_rows * L * itemsize
    # Double-buffered in + out blocks + headroom; stays under v7x's 64 MiB.
    vmem_limit = int(min(48 * _MiB, max(32 * _MiB, 6 * block_bytes)))

    # NOTE: input_output_aliases={0: 0} + buffer donation would make this
    # copy in-place (halves HBM footprint -- matters most on 16 GiB v5e);
    # omitted so the eager demo keeps `x` alive.
    return pl.pallas_call(
        _vmem_copy_kernel,
        out_shape=jax.ShapeDtypeStruct((R, L), flat2d.dtype),
        grid_spec=pltpu.PrefetchScalarGridSpec(
            num_scalar_prefetch=0,
            grid=grid,
            in_specs=[pl.BlockSpec((tile_rows, L), lambda i: (i, 0))],
            out_specs=pl.BlockSpec((tile_rows, L), lambda i: (i, 0)),
        ),
        compiler_params=pltpu.CompilerParams(
            dimension_semantics=("parallel",),   # sharded across TCs on v7x
            vmem_limit_bytes=vmem_limit,
        ),
        cost_estimate=pl.CostEstimate(
            flops=0, transcendentals=0, bytes_accessed=2 * R * L * itemsize),
    )(flat2d)


def _materialized_copy(flat2d):
    if _hbm_dma_supported():
        return _hbm_dma_copy(flat2d)
    return _vmem_pipeline_copy(flat2d)


# ------------------------------ Module wrapper -------------------------------
class Reshape:
    """JAX/Pallas equivalent of the PyTorch Reshape(nn.Module)."""

    def __init__(self, *args, force_materialize=False):
        self.shape = args
        self.force_materialize = force_materialize

    def _resolve_shape(self, numel):
        # Replicate torch.view's handling of a single -1 dimension.
        shape = list(self.shape)
        if -1 in shape:
            idx = shape.index(-1)
            known = 1
            for j, s in enumerate(shape):
                if j != idx:
                    known *= s
            assert known > 0 and numel % known == 0, "invalid shape for view"
            shape[idx] = numel // known
        assert math.prod(shape) == numel, "shape incompatible with input numel"
        return tuple(shape)

    def __call__(self, x):
        numel = x.size
        target_shape = self._resolve_shape(numel)

        # Default: a contiguous view is metadata-only -> XLA bitcast, no HBM
        # traffic, no kernel launch.  Bit-identical to torch .view.
        if not self.force_materialize or numel == 0 or numel % 128 != 0:
            return jnp.reshape(x, target_shape)

        # Forced materialization: stream the row-major flat element order
        # through a Pallas copy (order preserved -> exact .view semantics),
        # then apply the target shape as zero-cost metadata glue.
        lane = 128
        flat2d = jnp.reshape(x, (numel // lane, lane))
        out2d = _materialized_copy(flat2d)
        return jnp.reshape(out2d, target_shape)


# ----------------------------------- main ------------------------------------
if __name__ == "__main__":
    k0, k1 = jax.random.split(jax.random.PRNGKey(0))

    # Small NCHW input, as typically used before a fully-connected layer:
    # (B, C, H, W) -> (B, C*H*W)
    B, C, H, W = 2, 4, 16, 16
    x = jax.random.normal(k0, (B, C, H, W), dtype=jnp.float32)
    ref = jnp.reshape(x, (B, C * H * W))

    # Default (metadata-only) path -- the recommended fast path.
    y_view = jax.block_until_ready(Reshape(B, -1)(x))
    assert y_view.shape == (B, C * H * W) and y_view.dtype == x.dtype
    assert bool(jnp.array_equal(y_view, ref))

    # Forced-materialize path -- exercises the Pallas copy kernel.
    y_mat = jax.block_until_ready(Reshape(B, -1, force_materialize=True)(x))
    assert y_mat.shape == (B, C * H * W) and y_mat.dtype == x.dtype
    assert bool(jnp.array_equal(y_mat, ref))

    # Slightly larger case exercising the multi-chunk / multi-block path.
    x2 = jax.random.normal(k1, (8, 64, 128), dtype=jnp.float32)
    ref2 = jnp.reshape(x2, (8, 64 * 128))
    y2 = jax.block_until_ready(Reshape(8, -1, force_materialize=True)(x2))
    assert y2.shape == (8, 64 * 128) and y2.dtype == x2.dtype
    assert bool(jnp.array_equal(y2, ref2))

    print("KERNEL_OK")
</pallas_src>

<mosaic_0001>
module attributes {stable_mosaic.version = 11 : i64} {
  func.func @_hbm_dma_copy_kernel(%arg0: memref<16x128xf32, #tpu.memory_space<any>>, %arg1: memref<16x128xf32, #tpu.memory_space<any>>, %arg2: memref<2x!tpu.dma_semaphore, #tpu.memory_space<semaphore_mem>>) attributes {dimension_semantics = [], scalar_prefetch = 0 : i64, scratch_operands = 1 : i64, tpu.core_type = #tpu.core_type<tc>} {
    %c0_i32 = arith.constant 0 : i32
    %c0_i32_0 = arith.constant 0 : i32
    %c0_i32_1 = arith.constant 0 : i32
    %0 = tpu.memref_slice %arg0[%c0_i32_0, %c0_i32_1] : memref<16x128xf32, #tpu.memory_space<any>> -> memref<8x128xf32, #tpu.memory_space<any>>
    %c0_i32_2 = arith.constant 0 : i32
    %c0_i32_3 = arith.constant 0 : i32
    %1 = tpu.memref_slice %arg1[%c0_i32_2, %c0_i32_3] : memref<16x128xf32, #tpu.memory_space<any>> -> memref<8x128xf32, #tpu.memory_space<any>>
    %2 = tpu.memref_slice %arg2[%c0_i32] : memref<2x!tpu.dma_semaphore, #tpu.memory_space<semaphore_mem>> -> memref<1x!tpu.dma_semaphore, #tpu.memory_space<semaphore_mem>>
    %3 = tpu.memref_squeeze %2 : memref<1x!tpu.dma_semaphore, #tpu.memory_space<semaphore_mem>> -> memref<!tpu.dma_semaphore, #tpu.memory_space<semaphore_mem>>
    tpu.enqueue_dma source(%0 : memref<8x128xf32, #tpu.memory_space<any>>) target(%1 : memref<8x128xf32, #tpu.memory_space<any>>) target_semaphore(%3 : memref<!tpu.dma_semaphore, #tpu.memory_space<semaphore_mem>>)
    %c1_i32 = arith.constant 1 : i32
    %c8_i32 = arith.constant 8 : i32
    %c0_i32_4 = arith.constant 0 : i32
    %4 = tpu.memref_slice %arg0[%c8_i32, %c0_i32_4] : memref<16x128xf32, #tpu.memory_space<any>> -> memref<8x128xf32, #tpu.memory_space<any>>
    %c8_i32_5 = arith.constant 8 : i32
    %c0_i32_6 = arith.constant 0 : i32
    %5 = tpu.memref_slice %arg1[%c8_i32_5, %c0_i32_6] : memref<16x128xf32, #tpu.memory_space<any>> -> memref<8x128xf32, #tpu.memory_space<any>>
    %6 = tpu.memref_slice %arg2[%c1_i32] : memref<2x!tpu.dma_semaphore, #tpu.memory_space<semaphore_mem>> -> memref<1x!tpu.dma_semaphore, #tpu.memory_space<semaphore_mem>>
    %7 = tpu.memref_squeeze %6 : memref<1x!tpu.dma_semaphore, #tpu.memory_space<semaphore_mem>> -> memref<!tpu.dma_semaphore, #tpu.memory_space<semaphore_mem>>
    tpu.enqueue_dma source(%4 : memref<8x128xf32, #tpu.memory_space<any>>) target(%5 : memref<8x128xf32, #tpu.memory_space<any>>) target_semaphore(%7 : memref<!tpu.dma_semaphore, #tpu.memory_space<semaphore_mem>>)
    %c0_i32_7 = arith.constant 0 : i32
    %c0_i32_8 = arith.constant 0 : i32
    %c0_i32_9 = arith.constant 0 : i32
    %8 = tpu.memref_slice %arg0[%c0_i32_8, %c0_i32_9] : memref<16x128xf32, #tpu.memory_space<any>> -> memref<8x128xf32, #tpu.memory_space<any>>
    %c0_i32_10 = arith.constant 0 : i32
    %c0_i32_11 = arith.constant 0 : i32
    %9 = tpu.memref_slice %arg1[%c0_i32_10, %c0_i32_11] : memref<16x128xf32, #tpu.memory_space<any>> -> memref<8x128xf32, #tpu.memory_space<any>>
    %10 = tpu.memref_slice %arg2[%c0_i32_7] : memref<2x!tpu.dma_semaphore, #tpu.memory_space<semaphore_mem>> -> memref<1x!tpu.dma_semaphore, #tpu.memory_space<semaphore_mem>>
    %11 = tpu.memref_squeeze %10 : memref<1x!tpu.dma_semaphore, #tpu.memory_space<semaphore_mem>> -> memref<!tpu.dma_semaphore, #tpu.memory_space<semaphore_mem>>
    tpu.wait_dma2 semaphore(%11 : memref<!tpu.dma_semaphore, #tpu.memory_space<semaphore_mem>>) src(%8 : memref<8x128xf32, #tpu.memory_space<any>>) dst(%9 : memref<8x128xf32, #tpu.memory_space<any>>)
    %c1_i32_12 = arith.constant 1 : i32
    %c8_i32_13 = arith.constant 8 : i32
    %c0_i32_14 = arith.constant 0 : i32
    %12 = tpu.memref_slice %arg0[%c8_i32_13, %c0_i32_14] : memref<16x128xf32, #tpu.memory_space<any>> -> memref<8x128xf32, #tpu.memory_space<any>>
    %c8_i32_15 = arith.constant 8 : i32
    %c0_i32_16 = arith.constant 0 : i32
    %13 = tpu.memref_slice %arg1[%c8_i32_15, %c0_i32_16] : memref<16x128xf32, #tpu.memory_space<any>> -> memref<8x128xf32, #tpu.memory_space<any>>
    %14 = tpu.memref_slice %arg2[%c1_i32_12] : memref<2x!tpu.dma_semaphore, #tpu.memory_space<semaphore_mem>> -> memref<1x!tpu.dma_semaphore, #tpu.memory_space<semaphore_mem>>
    %15 = tpu.memref_squeeze %14 : memref<1x!tpu.dma_semaphore, #tpu.memory_space<semaphore_mem>> -> memref<!tpu.dma_semaphore, #tpu.memory_space<semaphore_mem>>
    tpu.wait_dma2 semaphore(%15 : memref<!tpu.dma_semaphore, #tpu.memory_space<semaphore_mem>>) src(%12 : memref<8x128xf32, #tpu.memory_space<any>>) dst(%13 : memref<8x128xf32, #tpu.memory_space<any>>)
    return
  }
}

module attributes {stable_mosaic.version = 11 : i64} {
  func.func @_vmem_copy_kernel(%arg0: i32, %arg1: memref<16x128xf32, #tpu.memory_space<vmem>>, %arg2: memref<16x128xf32, #tpu.memory_space<vmem>>) attributes {dimension_semantics = [#tpu.dimension_semantics<parallel>], iteration_bounds = array<i64: 1>, scalar_prefetch = 0 : i64, scratch_operands = 0 : i64, tpu.core_type = #tpu.core_type<tc>, window_params = [{transform_indices = @transform_0, window_bounds = array<i64: 16, 128>}, {transform_indices = @transform_1, window_bounds = array<i64: 16, 128>}]} {
    %c0 = arith.constant 0 : index
    %c0_0 = arith.constant 0 : index
    %0 = vector.load %arg1[%c0, %c0_0] : memref<16x128xf32, #tpu.memory_space<vmem>>, vector<16x128xf32>
    %c0_1 = arith.constant 0 : index
    %c0_2 = arith.constant 0 : index
    %1 = vector.load %arg2[%c0_1, %c0_2] : memref<16x128xf32, #tpu.memory_space<vmem>>, vector<16x128xf32>
    tpu.vector_store %arg2[%c0_1, %c0_2], %0 {strides = array<i32>} : memref<16x128xf32, #tpu.memory_space<vmem>>, vector<16x128xf32>,
    return
  }
  func.func @transform_0(%arg0: i32) -> (i32, i32) {
    %c0_i32 = arith.constant 0 : i32
    %c0_i32_0 = arith.constant 0 : i32
    return %arg0, %c0_i32 : i32, i32
  }
  func.func @transform_1(%arg0: i32) -> (i32, i32) {
    %c0_i32 = arith.constant 0 : i32
    %c0_i32_0 = arith.constant 0 : i32
    return %arg0, %c0_i32 : i32, i32
  }
}

</mosaic_0001>

<llo_original>
// kernel: tpu_custom_call.1
$region0: #{tpu_custom_call.1}
  #allocation0 [shape = 'u32[]', space=smem, size = 0x4, offset = 0x4, fixed_abs, tag = 'smem constant byte address 0x4 - core index']
  #allocation1 [shape = 'u32[144,128]{1,0:T(1,128)}', space=vmem, size = 0x12000, scoped, tag = 'internal scratch']
  #allocation2 [shape = 's32[2]{0}', space=sflag, size = 0x8, scoped, tag = 'scratch operand']
  #allocation3 [shape = 's32[]', space=sflag, size = 0x4, offset = 0, fixed_abs, tag = 'sflag constant byte address 0x0 - dummy sync flag']
  #allocation4 [shape = 'u32[0]{0}', space=smem, size = 0, offset = 0, fixed_abs, tag = 'smem constant byte address 0x0 - null']
  #allocation5 [shape = 's32[]', space=sflag, size = 0x4, offset = 0, fixed_abs, tag = 'sflag constant byte address 0x0 - dummy sync flag']
  #allocation6 [shape = 'u32[0]{0}', space=smem, size = 0, offset = 0, fixed_abs, tag = 'smem constant byte address 0x0 - null']
  %s0 = inlined_call_operand.hbm [shape: f32[16,128], index: 0, kind: input, shape index: {}]
  %s1 = inlined_call_operand.hbm [shape: f32[16,128], index: 1, kind: output, shape index: {}]
  %s2 = sld [smem:[#allocation0]]
  $region2: #{tpu_custom_call.1} parent=0
    _
  %s4 = ssub.s32 1, %s2
  %s5 = scalar_select 0, %s4, %s2
  %s7 = sshll.u32 1, 14
  %s8 = sxor.u32 4294967295, %s7
  %s11 = sshll.u32 3, 24
  %s12 = sxor.u32 4294967295, %s11
  %s13 = sand.u32 0, %s12
  %s15 = sor.u32 %s13, 0
  %18 = dma.general %s0, 128, %s1, [#allocation2], [#allocation3], [#allocation4], %s15, 0
  %s19 = scalar_lea.hbm %s0, 128
  %s20 = scalar_lea.hbm %s1, 128
  %s21 = scalar_lea.sflag [#allocation2], 1
  %s23 = sshll.u32 1, 14
  %s24 = sxor.u32 4294967295, %s23
  %s27 = sshll.u32 3, 24
  %s28 = sxor.u32 4294967295, %s27
  %s29 = sand.u32 0, %s28
  %s31 = sor.u32 %s29, 0
  %34 = dma.general %s19, 128, %s20, %s21, [#allocation5], [#allocation6], %s31, 0
  %s35 = smul.u32 8, 1
  %s36 = sshll.u32 %s35, 4
  %37 = dma.done [#allocation2], %s36
  %s38 = sshll.u32 %s35, 4
  %39 = dma.done %s21, %s38
  %40 = vsyncmov [#allocation2]
  %s41 = vpop.sfrf %40
  %p42 = scmp.eq.s32.totalorder %s41, 0
  %p43 = pneg %p42
  %45 = shalt.err (%p43)
  %s46 = scalar_lea.sflag [#allocation2], 1
  %47 = vsyncmov %s46
  %s48 = vpop.sfrf %47
  %p49 = scmp.eq.s32.totalorder %s48, 0
  %p50 = pneg %p49
  %52 = shalt.err (%p50)

// kernel: tpu_custom_call.1
$region0: #{tpu_custom_call.1}
  #allocation0 [shape = 'u32[]', space=smem, size = 0x4, offset = 0x4, fixed_abs, tag = 'smem constant byte address 0x4 - core index']
  #allocation1 [shape = 'u32[144,128]{1,0:T(1,128)}', space=vmem, size = 0x12000, scoped, tag = 'internal scratch']
  %s0 = inlined_call_operand.hbm [shape: f32[16,128], index: 0, kind: input, shape index: {}]
  %s1 = inlined_call_operand.hbm [shape: f32[16,128], index: 1, kind: output, shape index: {}]
  %s2 = sld [smem:[#allocation0]]
  $region18: #{tpu_custom_call.1} parent=0
    _
  %s4 = ssub.s32 1, %s2
  %s5 = scalar_select 0, %s4, %s2
  $region1: #{tpu_custom_call.1} parent=0
    #allocation2 [shape = 'u8[8192]{0}', space=vmem, size = 0x2000, scoped, tag = 'input window, operand 0, single buffered']
    #allocation3 [shape = 's32[1]{0}', space=sflag, size = 0x4, scoped, tag = 'scoped memory for tpu_custom_call.1']
    #allocation4 [shape = 's32[1]{0}', space=sflag, size = 0x4, scoped, tag = 'scoped memory for tpu_custom_call.1']
    #allocation5 [shape = 'u8[8192]{0}', space=vmem, size = 0x2000, scoped, tag = 'output window, operand 0, single buffered']
    %6 = vsyncpa [#allocation3], 0
    %7 = vsyncpa [#allocation4], 0
    // Predicated region
    $region2: #{tpu_custom_call.1} parent=1 // pred_check
      _
    $region3: #{tpu_custom_call.1} parent=1 // pred_check_branch
      %9 = sbr.rel (0) target = $region5
    $region4: #{tpu_custom_call.1} parent=1 // pred_region
      %s11 = ssub.s32 256, 256
      %12 = vsyncadd [#allocation3], %s11
      %s13 = sshll.u32 [#allocation2], 4
      %s14 = int_to_ptr.vmem [resolvable:$true] %s13
      %19 = dma.hbm_to_vmem [thread:$0]  %s0, 256, %s14, [#allocation3], 128, 128, 8
    $region5: #{tpu_custom_call.1} parent=1 // pred_fallthru
      _
    // Predicated region
    $region6: #{tpu_custom_call.1} parent=1 // pred_check
      _
    $region7: #{tpu_custom_call.1} parent=1 // pred_check_branch
      %21 = sbr.rel (0) target = $region9
    $region8: #{tpu_custom_call.1} parent=1 // pred_region
      %22 = dma.done [#allocation3], 256
    $region9: #{tpu_custom_call.1} parent=1 // pred_fallthru
      _
    %v23 = vld [vmem:[#allocation2] sm:$0xff]
    %v24 = vld [vmem:[#allocation2 + $0x8] sm:$0xff]
    %25 = vst [vmem:[#allocation5] sm:$0xff] %v23
    %26 = vst [vmem:[#allocation5 + $0x8] sm:$0xff] %v24
    // Predicated region
    $region10: #{tpu_custom_call.1} parent=1 // pred_check
      _
    $region11: #{tpu_custom_call.1} parent=1 // pred_check_branch
      %28 = sbr.rel (0) target = $region13
    $region12: #{tpu_custom_call.1} parent=1 // pred_region
      %s30 = ssub.s32 256, 256
      %31 = vsyncadd [#allocation4], %s30
      %s32 = sshll.u32 [#allocation5], 4
      %s33 = int_to_ptr.vmem [resolvable:$true] %s32
      %38 = dma.vmem_to_hbm [thread:$0]  %s33, 256, %s1, [#allocation4], 128, 128, 8
    $region13: #{tpu_custom_call.1} parent=1 // pred_fallthru
      _
    // Predicated region
    $region14: #{tpu_custom_call.1} parent=1 // pred_check
      _
    $region15: #{tpu_custom_call.1} parent=1 // pred_check_branch
      %40 = sbr.rel (0) target = $region17
    $region16: #{tpu_custom_call.1} parent=1 // pred_region
      %41 = dma.done [#allocation4], 256
    $region17: #{tpu_custom_call.1} parent=1 // pred_fallthru
      _
    %42 = vsyncpa [#allocation3], 1
    %43 = vsyncpa [#allocation4], 1

</llo_original>
